<compile_context>
chip_gen: v5e
topology: v5e:2x2
jax: 0.10.0
libtpu: 0.0.40
codegen_flags: <defaults>
</compile_context>

<pallas_src>
import functools
import math

import jax
import jax.numpy as jnp
from jax import lax
from jax.experimental import pallas as pl
from jax.experimental.pallas import tpu as pltpu


NEG_INF = -1e30


def _round_up(x, m):
    return ((x + m - 1) // m) * m


def _nbytes(a):
    return int(a.size) * a.dtype.itemsize


# ----------------------------- in-kernel helpers -----------------------------

def _layernorm(x, gamma, beta, eps=1e-5):
    mu = jnp.mean(x, axis=-1, keepdims=True)
    var = jnp.mean((x - mu) ** 2, axis=-1, keepdims=True)
    return (x - mu) * lax.rsqrt(var + eps) * gamma + beta


def _softmax(x, *, approx=True):
    m = jnp.max(x, axis=-1, keepdims=True)
    e = jnp.exp(x - m)
    s = jnp.sum(e, axis=-1, keepdims=True)
    if approx:
        return e * pl.reciprocal(s, approx=True)
    return e / s


def _gelu(x):
    # TODO(synk): PyTorch nn.GELU() uses the exact erf form; the tanh
    # approximation is used because erf lowering in Mosaic is not guaranteed
    # (numerically very close).
    c = math.sqrt(2.0 / math.pi)
    return 0.5 * x * (1.0 + jnp.tanh(c * (x + 0.044715 * x * x * x)))


# --------------------------------- kernels -----------------------------------

def _patch_embed_kernel(xp_ref, w_ref, b_ref, o_ref):
    # (tm, C*P*P)bf16 @ (C*P*P, dim)bf16 + bias(f32) == Conv2d(kernel=stride=P)
    o_ref[...] = (
        jnp.dot(xp_ref[...], w_ref[...], preferred_element_type=jnp.float32)
        + b_ref[...]
    )


def _layer_kernel(
    x_ref, ln1g_ref, ln1b_ref, wqkvg_ref, bqkvg_ref, wgp_ref, bgp_ref,
    wproj_ref, bproj_ref, ln2g_ref, ln2b_ref, w1_ref, b1_ref, w2_ref, b2_ref,
    o_ref, *, k_top, n_valid, n_q, dim,
):
    # Fused TransformerBlock: LN1 + SoftGroupAttention + residual, then
    # LN2 + FeedForward + residual, one batch element per grid step.
    # x_ref view is (n_pad, dim); only the first n_valid rows/cols are real.
    x = x_ref[...]                                          # f32 (n_pad, dim)
    n_pad = x.shape[0]

    # pad rows (>= n_q) pass straight through: they start at 0 and never feed
    # real rows (pad key columns are masked below).
    if n_q < n_pad:
        o_ref[pl.ds(n_q, n_pad - n_q), :] = x[n_q:, :]

    h = _layernorm(x, ln1g_ref[...], ln1b_ref[...]).astype(jnp.bfloat16)
    qkvg = jnp.dot(h, wqkvg_ref[...], preferred_element_type=jnp.float32) \
        + bqkvg_ref[...]

    # query side restricted to n_q rows; key side keeps full n_pad (lane-dense).
    q = qkvg[:n_q, 0 * dim:1 * dim].astype(jnp.bfloat16)
    k = qkvg[:, 1 * dim:2 * dim].astype(jnp.bfloat16)
    v = qkvg[:, 2 * dim:3 * dim].astype(jnp.bfloat16)
    g = qkvg[:, 3 * dim:4 * dim].astype(jnp.bfloat16)

    dn_nt = (((1,), (1,)), ((), ()))                        # A @ B^T
    # attention scale is already folded into the Q columns of wqkvg / bqkvg.
    scores = lax.dot_general(q, k, dn_nt,
                             preferred_element_type=jnp.float32)  # (n_q,n_pad)

    col_valid = lax.broadcasted_iota(jnp.int32, (1, n_pad), 1) < n_valid

    # group probabilities; 1/t folded into wgp, pad gp columns killed by bgp
    # (= NEG_INF).  Exact division here because gw feeds the top-k threshold.
    gw = _softmax(jnp.dot(g, wgp_ref[...], preferred_element_type=jnp.float32)
                  + bgp_ref[...], approx=False)
    gwb = gw.astype(jnp.bfloat16)
    gw2 = lax.dot_general(gwb[:n_q], gwb, dn_nt,
                          preferred_element_type=jnp.float32)   # (n_q, n_pad)

    if k_top < n_valid:
        # keep_top_values: per-row bisection for the k-th largest value over
        # the n_valid real columns.  gw2 entries are inner products of softmax
        # rows, hence in (0, 1] -> constant bounds, 20 iterations.
        validf = col_valid.astype(jnp.float32)

        def body(_, lohi):
            lo, hi = lohi
            mid = 0.5 * (lo + hi)
            cnt = jnp.sum(jnp.where(gw2 >= mid, validf, 0.0), axis=-1,
                          keepdims=True)
            ge = cnt >= k_top
            return (jnp.where(ge, mid, lo), jnp.where(ge, hi, mid))

        lo0 = jnp.zeros((n_q, 1), jnp.float32)
        hi0 = jnp.ones((n_q, 1), jnp.float32)
        thresh, _ = lax.fori_loop(0, 20, body, (lo0, hi0))
        keep = jnp.logical_and(gw2 >= thresh, col_valid)
        scores = jnp.where(keep, scores, NEG_INF)
    else:
        # keep_ratio == 1.0: mask keeps everything real; only exclude pad keys.
        scores = jnp.where(col_valid, scores, NEG_INF)

    # single masked softmax == softmax * mask renormalized (reference +1e-8
    # epsilon dropped).
    aw = _softmax(scores).astype(jnp.bfloat16)
    attn_out = jnp.dot(aw, v, preferred_element_type=jnp.float32)
    proj = jnp.dot(attn_out.astype(jnp.bfloat16), wproj_ref[...],
                   preferred_element_type=jnp.float32) + bproj_ref[...]
    a = x[:n_q, :] + proj                                   # residual 1

    # FeedForward (LN2 + Linear/GELU/Linear) on the same n_q rows.
    h2 = _layernorm(a, ln2g_ref[...], ln2b_ref[...]).astype(jnp.bfloat16)
    hid = _gelu(jnp.dot(h2, w1_ref[...], preferred_element_type=jnp.float32)
                + b1_ref[...])
    ff = jnp.dot(hid.astype(jnp.bfloat16), w2_ref[...],
                 preferred_element_type=jnp.float32) + b2_ref[...]
    o_ref[pl.ds(0, n_q), :] = a + ff                        # residual 2


def _head_kernel(x_ref, fng_ref, fnb_ref, hng_ref, hnb_ref, wh_ref, bh_ref,
                 o_ref):
    # final transformer LayerNorm (cls token only), head LayerNorm, Linear.
    x = _layernorm(x_ref[...], fng_ref[...], fnb_ref[...])
    x = _layernorm(x, hng_ref[...], hnb_ref[...]).astype(jnp.bfloat16)
    o_ref[...] = jnp.dot(x, wh_ref[...], preferred_element_type=jnp.float32) \
        + bh_ref[...]


# --------------------------------- wrappers ----------------------------------

def _const_spec(arr):
    # Weight blocks never change across the grid: single-buffer them.
    nd = arr.ndim
    return pl.BlockSpec(arr.shape, lambda *_, _nd=nd: (0,) * _nd,
                        pipeline_mode=pl.Buffered(1))


def _vmem_cap_bytes():
    # Generation-aware cap: ~70% of physical on 128 MiB parts (v5e/v6e),
    # ~50% on 64 MiB parts (v7x).  Fallback if the query is unavailable.
    try:
        phys = int(pltpu.get_tpu_info().vmem_capacity_bytes)
    except Exception:
        phys = 128 * 2**20
    frac = 0.7 if phys >= 100 * 2**20 else 0.5
    return int(phys * frac)


def _mosaic_params(est_bytes, semantics=None):
    limit = int(min(max(2 * est_bytes, 16 * 2**20), _vmem_cap_bytes()))
    return pltpu.CompilerParams(dimension_semantics=semantics,
                                vmem_limit_bytes=limit)


def _run_layer(tokens, lp, *, k_top, n_valid, n_q):
    B, n_pad, dim = tokens.shape
    mlp = lp["w1"].shape[1]
    gp_pad = lp["wgp"].shape[1]
    names = ("ln1_g", "ln1_b", "wqkvg", "bqkvg", "wgp", "bgp",
             "wproj", "bproj", "ln2_g", "ln2_b", "w1", "b1", "w2", "b2")
    weights = [lp[name] for name in names]

    kernel = functools.partial(_layer_kernel, k_top=k_top, n_valid=n_valid,
                               n_q=n_q, dim=dim)
    # NOTE: the q@k^T / gw@gw^T dot_generals use a (1,1) contraction so the
    # transpose stays inside the MXU push (no XLU vxpose of k).
    est = (sum(_nbytes(w) for w in weights)
           + 3 * n_pad * dim * 4            # x in/out + LN activations
           + n_pad * 4 * dim * 4            # qkvg f32
           + n_pad * gp_pad * 4             # gw
           + 5 * n_q * n_pad * 4            # scores / gw2 / keep / aw
           + n_q * mlp * 4                  # FFN hidden
           + 4 * n_q * dim * 4)
    return pl.pallas_call(
        kernel,
        out_shape=jax.ShapeDtypeStruct((B, n_pad, dim), jnp.float32),
        grid=(B,),
        in_specs=[pl.BlockSpec((None, n_pad, dim), lambda b: (b, 0, 0))]
                 + [_const_spec(w) for w in weights],
        out_specs=pl.BlockSpec((None, n_pad, dim), lambda b: (b, 0, 0)),
        compiler_params=_mosaic_params(est, ("parallel",)),
    )(tokens, *weights)


def vit_forward(x_nchw, params, *, patch_size):
    B, C, H, W = x_nchw.shape
    P = patch_size
    Hp, Wp = H // P, W // P
    Np = Hp * Wp
    dim = params["patch_w"].shape[1]
    K = C * P * P

    # glue: extract non-overlapping patches, flattened (c, ph, pw) to match
    # Conv2d weight flattening; bf16 operands for the MXU.
    xp = x_nchw.reshape(B, C, Hp, P, Wp, P).transpose(0, 2, 4, 1, 3, 5)
    xp = xp.reshape(B * Np, K).astype(jnp.bfloat16)

    M = B * Np
    tm = min(512, _round_up(M, 8))
    M_pad = _round_up(M, tm)
    if M_pad != M:
        xp = jnp.pad(xp, ((0, M_pad - M), (0, 0)))

    est = (4 * tm * K * 2 + 4 * tm * dim * 4
           + _nbytes(params["patch_w"]) + _nbytes(params["patch_b"]))
    patches = pl.pallas_call(
        _patch_embed_kernel,
        out_shape=jax.ShapeDtypeStruct((M_pad, dim), jnp.float32),
        grid=(M_pad // tm,),
        in_specs=[pl.BlockSpec((tm, K), lambda r: (r, 0)),
                  _const_spec(params["patch_w"]),
                  _const_spec(params["patch_b"])],
        out_specs=pl.BlockSpec((tm, dim), lambda r: (r, 0)),
        compiler_params=_mosaic_params(est, ("parallel",)),
    )(xp, params["patch_w"], params["patch_b"])
    patches = patches[:M].reshape(B, Np, dim)

    # glue: cls token concat + positional embedding, then pad tokens to a
    # lane-dense count (pad rows/cols are masked inside the layer kernel).
    cls = jnp.broadcast_to(params["cls"], (B, 1, dim))
    tokens = jnp.concatenate([cls, patches], axis=1) + params["pos"]
    n = Np + 1
    n_pad = _round_up(n, 128)
    n_q = _round_up(n, 8)                 # query-side rows actually computed
    if n_pad != n:
        tokens = jnp.pad(tokens, ((0, 0), (0, n_pad - n), (0, 0)))

    for i, lp in enumerate(params["layers"]):
        keep_ratio = 1.0 - 0.8 / 11 * i           # same schedule as Transformer
        k_top = max(int(n * keep_ratio), 1)
        tokens = _run_layer(tokens, lp, k_top=k_top, n_valid=n, n_q=n_q)

    x0 = tokens[:, 0, :]                          # cls token (always valid)
    nc_pad = params["head_w"].shape[1]
    est = (_nbytes(x0) + _nbytes(params["head_w"]) + B * nc_pad * 4 + (1 << 20))
    logits_p = pl.pallas_call(
        _head_kernel,
        out_shape=jax.ShapeDtypeStruct((B, nc_pad), jnp.float32),
        compiler_params=_mosaic_params(est),
    )(x0, params["final_ln_g"], params["final_ln_b"],
      params["head_ln_g"], params["head_ln_b"],
      params["head_w"], params["head_b"])
    return logits_p[:, :params["num_classes"]]


# ---------------------------- parameter handling ------------------------------

def init_vit_params(key, *, image_size, patch_size, num_classes, dim, depth,
                    mlp_dim, channels, gp_num):
    num_patches = (image_size // patch_size) ** 2
    keys = jax.random.split(key, 4 + depth)

    def nrm(k, shape, s=0.02):
        return (s * jax.random.normal(k, shape)).astype(jnp.float32)

    params = {
        "patch_w": nrm(keys[0], (channels * patch_size * patch_size, dim)),
        "patch_b": jnp.zeros((1, dim), jnp.float32),
        "cls": nrm(keys[1], (1, 1, dim)),
        "pos": nrm(keys[2], (1, num_patches + 1, dim)),
        "final_ln_g": jnp.ones((1, dim), jnp.float32),
        "final_ln_b": jnp.zeros((1, dim), jnp.float32),
        "head_ln_g": jnp.ones((1, dim), jnp.float32),
        "head_ln_b": jnp.zeros((1, dim), jnp.float32),
        "head_w": nrm(keys[3], (dim, num_classes)),
        "head_b": jnp.zeros((1, num_classes), jnp.float32),
        "layers": [],
    }
    for i in range(depth):
        lk = jax.random.split(keys[4 + i], 5)
        params["layers"].append({
            "ln1_g": jnp.ones((1, dim), jnp.float32),
            "ln1_b": jnp.zeros((1, dim), jnp.float32),
            "wqkvg": nrm(lk[0], (dim, 4 * dim)),
            "bqkvg": jnp.zeros((1, 4 * dim), jnp.float32),
            "wgp": nrm(lk[1], (dim, gp_num)),
            "wproj": nrm(lk[2], (dim, dim)),
            "bproj": jnp.zeros((1, dim), jnp.float32),
            "ln2_g": jnp.ones((1, dim), jnp.float32),
            "ln2_b": jnp.zeros((1, dim), jnp.float32),
            "w1": nrm(lk[3], (dim, mlp_dim)),
            "b1": jnp.zeros((1, mlp_dim), jnp.float32),
            "w2": nrm(lk[4], (mlp_dim, dim)),
            "b2": jnp.zeros((1, dim), jnp.float32),
        })
    return params


def prepare_vit_params(params, *, t):
    """One-time host-side prep: bf16 matmul weights, fold attention scale into
    the Q slice of wqkvg, fold 1/t into wgp, pad gp_num to 128 (pad columns get
    a NEG_INF bias so their softmax probability is 0), pad head to 128."""
    dim = params["patch_w"].shape[1]
    scale = dim ** (-0.5)
    nc = params["head_w"].shape[1]
    nc_pad = _round_up(nc, 128)
    gp_num = params["layers"][0]["wgp"].shape[1]
    gp_pad = _round_up(gp_num, 128)
    bgp = jnp.concatenate(
        [jnp.zeros((1, gp_num), jnp.float32),
         jnp.full((1, gp_pad - gp_num), NEG_INF, jnp.float32)], axis=1)

    prep = {
        "patch_w": params["patch_w"].astype(jnp.bfloat16),
        "patch_b": params["patch_b"],
        "cls": params["cls"],
        "pos": params["pos"],
        "final_ln_g": params["final_ln_g"], "final_ln_b": params["final_ln_b"],
        "head_ln_g": params["head_ln_g"], "head_ln_b": params["head_ln_b"],
        "head_w": jnp.pad(params["head_w"],
                          ((0, 0), (0, nc_pad - nc))).astype(jnp.bfloat16),
        "head_b": jnp.pad(params["head_b"], ((0, 0), (0, nc_pad - nc))),
        "num_classes": nc,
        "layers": [],
    }
    for lp in params["layers"]:
        w = lp["wqkvg"]
        b = lp["bqkvg"]
        w = jnp.concatenate([w[:, :dim] * scale, w[:, dim:]], axis=1)
        b = jnp.concatenate([b[:, :dim] * scale, b[:, dim:]], axis=1)
        wgp = jnp.pad(lp["wgp"] / t, ((0, 0), (0, gp_pad - gp_num)))
        prep["layers"].append({
            "ln1_g": lp["ln1_g"], "ln1_b": lp["ln1_b"],
            "wqkvg": w.astype(jnp.bfloat16), "bqkvg": b,
            "wgp": wgp.astype(jnp.bfloat16), "bgp": bgp,
            "wproj": lp["wproj"].astype(jnp.bfloat16), "bproj": lp["bproj"],
            "ln2_g": lp["ln2_g"], "ln2_b": lp["ln2_b"],
            "w1": lp["w1"].astype(jnp.bfloat16), "b1": lp["b1"],
            "w2": lp["w2"].astype(jnp.bfloat16), "b2": lp["b2"],
        })
    return prep


if __name__ == "__main__":
    key = jax.random.PRNGKey(0)
    # small shapes consistent with the module (attn_mode='single' -> SoftGroupAttention)
    image_size, patch_size, channels = 16, 8, 4
    dim, depth, mlp_dim, gp_num, num_classes = 32, 2, 64, 8, 10
    t = 1.0

    pkey, xkey = jax.random.split(key)
    params = init_vit_params(
        pkey, image_size=image_size, patch_size=patch_size,
        num_classes=num_classes, dim=dim, depth=depth,
        mlp_dim=mlp_dim, channels=channels, gp_num=gp_num)
    prep = prepare_vit_params(params, t=t)

    x = jax.random.normal(xkey, (2, channels, image_size, image_size), jnp.float32)
    logits = vit_forward(x, prep, patch_size=patch_size)
    jax.block_until_ready(logits)
    assert logits.shape == (2, num_classes)
    print("KERNEL_OK")
</pallas_src>

<mosaic_0001>
module attributes {stable_mosaic.version = 11 : i64} {
  func.func @_patch_embed_kernel(%arg0: i32, %arg1: memref<8x256xbf16, #tpu.memory_space<vmem>>, %arg2: memref<256x32xbf16, #tpu.memory_space<vmem>>, %arg3: memref<1x32xf32, #tpu.memory_space<vmem>>, %arg4: memref<8x32xf32, #tpu.memory_space<vmem>>) attributes {dimension_semantics = [#tpu.dimension_semantics<parallel>], iteration_bounds = array<i64: 1>, scalar_prefetch = 0 : i64, scratch_operands = 0 : i64, tpu.core_type = #tpu.core_type<tc>, window_params = [{transform_indices = @transform_0, window_bounds = array<i64: 8, 256>}, {pipeline_mode = #tpu.pipeline_mode<synchronous>, transform_indices = @transform_1, window_bounds = array<i64: 256, 32>}, {pipeline_mode = #tpu.pipeline_mode<synchronous>, transform_indices = @transform_2, window_bounds = array<i64: 1, 32>}, {transform_indices = @transform_3, window_bounds = array<i64: 8, 32>}]} {
    %c0 = arith.constant 0 : index
    %c0_0 = arith.constant 0 : index
    %0 = vector.load %arg1[%c0, %c0_0] : memref<8x256xbf16, #tpu.memory_space<vmem>>, vector<8x256xbf16>
    %c0_1 = arith.constant 0 : index
    %c0_2 = arith.constant 0 : index
    %1 = vector.load %arg2[%c0_1, %c0_2] : memref<256x32xbf16, #tpu.memory_space<vmem>>, vector<256x32xbf16>
    %cst = arith.constant dense<0.000000e+00> : vector<8x32xf32>
    %2 = tpu.matmul %0, %1, %cst {dimension_numbers = #tpu.dot_dimension_numbers<[1], [0], [0], [1], [0, 0, 1, 1], [], []>} : vector<8x256xbf16>, vector<256x32xbf16>, vector<8x32xf32> -> vector<8x32xf32>
    %c0_3 = arith.constant 0 : index
    %c0_4 = arith.constant 0 : index
    %3 = vector.load %arg3[%c0_3, %c0_4] : memref<1x32xf32, #tpu.memory_space<vmem>>, vector<1x32xf32>
    %4 = vector.broadcast %3 : vector<1x32xf32> to vector<8x32xf32>
    %5 = arith.addf %2, %4 : vector<8x32xf32>
    %c0_5 = arith.constant 0 : index
    %c0_6 = arith.constant 0 : index
    %6 = vector.load %arg4[%c0_5, %c0_6] : memref<8x32xf32, #tpu.memory_space<vmem>>, vector<8x32xf32>
    tpu.vector_store %arg4[%c0_5, %c0_6], %5 {strides = array<i32>} : memref<8x32xf32, #tpu.memory_space<vmem>>, vector<8x32xf32>,
    return
  }
  func.func @transform_0(%arg0: i32) -> (i32, i32) {
    %c0_i32 = arith.constant 0 : i32
    %c0_i32_0 = arith.constant 0 : i32
    return %arg0, %c0_i32 : i32, i32
  }
  func.func @transform_1(%arg0: i32) -> (i32, i32) {
    %c0_i32 = arith.constant 0 : i32
    %c0_i32_0 = arith.constant 0 : i32
    %c0_i32_1 = arith.constant 0 : i32
    return %c0_i32, %c0_i32_0 : i32, i32
  }
  func.func @transform_2(%arg0: i32) -> (i32, i32) {
    %c0_i32 = arith.constant 0 : i32
    %c0_i32_0 = arith.constant 0 : i32
    %c0_i32_1 = arith.constant 0 : i32
    return %c0_i32, %c0_i32_0 : i32, i32
  }
  func.func @transform_3(%arg0: i32) -> (i32, i32) {
    %c0_i32 = arith.constant 0 : i32
    %c0_i32_0 = arith.constant 0 : i32
    return %arg0, %c0_i32 : i32, i32
  }
}

</mosaic_0001>

<llo_original>
// kernel: tpu_custom_call.1
$region0: #{tpu_custom_call.1}
  #allocation0 [shape = 'u32[]', space=smem, size = 0x4, offset = 0x4, fixed_abs, tag = 'smem constant byte address 0x4 - core index']
  #allocation1 [shape = 'u32[72,128]{1,0:T(1,128)}', space=vmem, size = 0x9000, scoped, tag = 'internal scratch']
  %s0 = inlined_call_operand.vmem [shape: bf16[8,256], index: 0, kind: input, shape index: {}]
  %s1 = inlined_call_operand.vmem [shape: bf16[256,32], index: 1, kind: input, shape index: {}]
  %s2 = inlined_call_operand.vmem [shape: f32[1,32], index: 2, kind: input, shape index: {}]
  %s3 = inlined_call_operand.hbm [shape: f32[8,32], index: 3, kind: output, shape index: {}]
  %s4 = sld [smem:[#allocation0]]
  $region22: #{tpu_custom_call.1} parent=0
    _
  %s6 = ssub.s32 1, %s4
  %s7 = scalar_select 0, %s6, %s4
  $region1: #{tpu_custom_call.1} parent=0
    #allocation2 [shape = 'u8[4096]{0}', space=vmem, size = 0x1000, scoped, tag = 'output window, operand 0, single buffered']
    #allocation3 [shape = 's32[1]{0}', space=sflag, size = 0x4, scoped, tag = 'scoped memory for tpu_custom_call.1']
    %8 = vsyncpa [#allocation3], 0
    // Predicated region
    $region2: #{tpu_custom_call.1} parent=1 // pred_check
      _
    $region3: #{tpu_custom_call.1} parent=1 // pred_check_branch
      %10 = sbr.rel (0) target = $region5
    $region4: #{tpu_custom_call.1} parent=1 // pred_region
      _
    $region5: #{tpu_custom_call.1} parent=1 // pred_fallthru
      _
    // Predicated region
    $region6: #{tpu_custom_call.1} parent=1 // pred_check
      _
    $region7: #{tpu_custom_call.1} parent=1 // pred_check_branch
      %12 = sbr.rel (0) target = $region9
    $region8: #{tpu_custom_call.1} parent=1 // pred_region
      _
    $region9: #{tpu_custom_call.1} parent=1 // pred_fallthru
      _
    // Predicated region
    $region10: #{tpu_custom_call.1} parent=1 // pred_check
      _
    $region11: #{tpu_custom_call.1} parent=1 // pred_check_branch
      %14 = sbr.rel (0) target = $region13
    $region12: #{tpu_custom_call.1} parent=1 // pred_region
      _
    $region13: #{tpu_custom_call.1} parent=1 // pred_fallthru
      _
    %v15 = vld [vmem:[%s0] sm:$0xff]
    %v16 = vld [vmem:[%s1] sm:$0xf]
    %v17 = vld [vmem:[%s1 + $0x4] sm:$0xf]
    %v18 = vld [vmem:[%s1 + $0x8] sm:$0xf]
    %v19 = vld [vmem:[%s1 + $0xc] sm:$0xf]
    %v20 = vld [vmem:[%s1 + $0x10] sm:$0xf]
    %v21 = vld [vmem:[%s1 + $0x14] sm:$0xf]
    %v22 = vld [vmem:[%s1 + $0x18] sm:$0xf]
    %v23 = vld [vmem:[%s1 + $0x1c] sm:$0xf]
    %v24 = vld [vmem:[%s1 + $0x20] sm:$0xf]
    %v25 = vld [vmem:[%s1 + $0x24] sm:$0xf]
    %v26 = vld [vmem:[%s1 + $0x28] sm:$0xf]
    %v27 = vld [vmem:[%s1 + $0x2c] sm:$0xf]
    %v28 = vld [vmem:[%s1 + $0x30] sm:$0xf]
    %v29 = vld [vmem:[%s1 + $0x34] sm:$0xf]
    %v30 = vld [vmem:[%s1 + $0x38] sm:$0xf]
    %v31 = vld [vmem:[%s1 + $0x3c] sm:$0xf]
    %v32 = vld [vmem:[%s1 + $0x40] sm:$0xf]
    %v33 = vld [vmem:[%s1 + $0x44] sm:$0xf]
    %v34 = vld [vmem:[%s1 + $0x48] sm:$0xf]
    %v35 = vld [vmem:[%s1 + $0x4c] sm:$0xf]
    %v36 = vld [vmem:[%s1 + $0x50] sm:$0xf]
    %v37 = vld [vmem:[%s1 + $0x54] sm:$0xf]
    %v38 = vld [vmem:[%s1 + $0x58] sm:$0xf]
    %v39 = vld [vmem:[%s1 + $0x5c] sm:$0xf]
    %v40 = vld [vmem:[%s1 + $0x60] sm:$0xf]
    %v41 = vld [vmem:[%s1 + $0x64] sm:$0xf]
    %v42 = vld [vmem:[%s1 + $0x68] sm:$0xf]
    %v43 = vld [vmem:[%s1 + $0x6c] sm:$0xf]
    %v44 = vld [vmem:[%s1 + $0x70] sm:$0xf]
    %v45 = vld [vmem:[%s1 + $0x74] sm:$0xf]
    %v46 = vld [vmem:[%s1 + $0x78] sm:$0xf]
    %v47 = vld [vmem:[%s1 + $0x7c] sm:$0xf]
    %v48 = vld [vmem:[%s2] sm:$0x1]
    %v50 = vperm.slane %v48, 0
    %v53 = vunpack.c.l.b16 %v15
    %v54 = vunpack.c.h.b16 %v15
    %v55 = vpack.c.b16 %v53, %v53
    %v56 = vpack.c.b16 %v54, %v54
    %v91 = vunpack.c.l.b16 %v16
    %v92 = vunpack.c.l.b16 %v17
    %v93 = vunpack.c.l.b16 %v18
    %v94 = vunpack.c.l.b16 %v19
    %v95 = vunpack.c.l.b16 %v20
    %v96 = vunpack.c.l.b16 %v21
    %v97 = vunpack.c.l.b16 %v22
    %v98 = vunpack.c.l.b16 %v23
    %v99 = vunpack.c.l.b16 %v24
    %v100 = vunpack.c.l.b16 %v25
    %v101 = vunpack.c.l.b16 %v26
    %v102 = vunpack.c.l.b16 %v27
    %v103 = vunpack.c.l.b16 %v28
    %v104 = vunpack.c.l.b16 %v29
    %v105 = vunpack.c.l.b16 %v30
    %v106 = vunpack.c.l.b16 %v31
    %v107 = vunpack.c.l.b16 %v32
    %v108 = vunpack.c.l.b16 %v33
    %v109 = vunpack.c.l.b16 %v34
    %v110 = vunpack.c.l.b16 %v35
    %v111 = vunpack.c.l.b16 %v36
    %v112 = vunpack.c.l.b16 %v37
    %v113 = vunpack.c.l.b16 %v38
    %v114 = vunpack.c.l.b16 %v39
    %v115 = vunpack.c.l.b16 %v40
    %v116 = vunpack.c.l.b16 %v41
    %v117 = vunpack.c.l.b16 %v42
    %v118 = vunpack.c.l.b16 %v43
    %v119 = vunpack.c.l.b16 %v44
    %v120 = vunpack.c.l.b16 %v45
    %v121 = vunpack.c.l.b16 %v46
    %v122 = vunpack.c.l.b16 %v47
    %v123 = vpack.c.b16 %v92, %v91
    %v124 = vpack.c.b16 %v94, %v93
    %v125 = vpack.c.b16 %v96, %v95
    %v126 = vpack.c.b16 %v98, %v97
    %v127 = vpack.c.b16 %v100, %v99
    %v128 = vpack.c.b16 %v102, %v101
    %v129 = vpack.c.b16 %v104, %v103
    %v130 = vpack.c.b16 %v106, %v105
    %v131 = vpack.c.b16 %v108, %v107
    %v132 = vpack.c.b16 %v110, %v109
    %v133 = vpack.c.b16 %v112, %v111
    %v134 = vpack.c.b16 %v114, %v113
    %v135 = vpack.c.b16 %v116, %v115
    %v136 = vpack.c.b16 %v118, %v117
    %v137 = vpack.c.b16 %v120, %v119
    %v138 = vpack.c.b16 %v122, %v121
    %155 = vmatpush.bf16.msra.mxu0 %v130
    %156 = vmatpush.bf16.msra.mxu0 %v129
    %157 = vmatpush.bf16.msra.mxu0 %v128
    %158 = vmatpush.bf16.msra.mxu0 %v127
    %159 = vmatpush.bf16.msra.mxu0 %v126
    %160 = vmatpush.bf16.msra.mxu0 %v125
    %161 = vmatpush.bf16.msra.mxu0 %v124
    %162 = vmatpush.bf16.msra.mxu0 %v123
    %163 = vmatmul.bf16.gmra.mxu0 %v55
    %v164 = vpop.f32.mrf.mxu0
    %v165 = vadd.f32 %v50, %v164
    %v166 = vpop.f32.mrf.mxu0
    %167 = vdwg.mxu0
    %168 = vmatpush.bf16.msra.mxu0 %v138
    %169 = vmatpush.bf16.msra.mxu0 %v137
    %170 = vmatpush.bf16.msra.mxu0 %v136
    %171 = vmatpush.bf16.msra.mxu0 %v135
    %172 = vmatpush.bf16.msra.mxu0 %v134
    %173 = vmatpush.bf16.msra.mxu0 %v133
    %174 = vmatpush.bf16.msra.mxu0 %v132
    %175 = vmatpush.bf16.msra.mxu0 %v131
    %176 = vmatmul.bf16.gmra.mxu0 %v56
    %v177 = vpop.f32.mrf.mxu0
    %v178 = vadd.f32 %v165, %v177
    %v179 = vpop.f32.mrf.mxu0
    %180 = vdwg.mxu0
    %vm181 = vcmask 261120
    %182 = vst.msk [vmem:[#allocation2] sm:$0xff] %vm181, %v178
    // Predicated region
    $region14: #{tpu_custom_call.1} parent=1 // pred_check
      _
    $region15: #{tpu_custom_call.1} parent=1 // pred_check_branch
      %184 = sbr.rel (0) target = $region17
    $region16: #{tpu_custom_call.1} parent=1 // pred_region
      %186 = vsyncadd [#allocation3], 0
      %s188 = sshll.u32 [#allocation2], 4
      %s189 = int_to_ptr.vmem [resolvable:$true] %s188
      %s190 = sshll.u32 %s3, 4
      %s191 = int_to_ptr.hbm [resolvable:$true] %s190
      %193 = dma.vmem_to_hbm [thread:$0]  %s189, 128, %s191, [#allocation3]
    $region17: #{tpu_custom_call.1} parent=1 // pred_fallthru
      _
    // Predicated region
    $region18: #{tpu_custom_call.1} parent=1 // pred_check
      _
    $region19: #{tpu_custom_call.1} parent=1 // pred_check_branch
      %195 = sbr.rel (0) target = $region21
    $region20: #{tpu_custom_call.1} parent=1 // pred_region
      %197 = dma.done [#allocation3], 128
    $region21: #{tpu_custom_call.1} parent=1 // pred_fallthru
      _
    %198 = vsyncpa [#allocation3], 1

</llo_original>
